<compile_context>
chip_gen: v6e
topology: v6e:2x2x1
jax: 0.10.0
libtpu: 0.0.40
codegen_flags: <defaults>
</compile_context>

<pallas_src>
from functools import partial

import jax
import jax.numpy as jnp
from jax.experimental import pallas as pl
from jax.experimental.pallas import tpu as pltpu

# Small, self-consistent hyperparameters
BATCH = 8
INPUT_DIM = 32
HIDDEN_DIM = 64
LATENT_DIM = 16
NUM_BLOCKS = 3


def encoder_kernel(x_ref, win_ref, bin_ref, w1_ref, b1_ref, w2_ref, b2_ref,
                   wout_ref, bout_ref, out_ref, *, num_blocks):
    """One batch-tile of the Encoder forward. All weights resident in VMEM.

    x_ref    : (TM, D_in)          bf16
    win_ref  : (D_in, H)   bf16    bin_ref  : (1, H)   f32
    w1_ref   : (NB, H, H)  bf16    b1_ref   : (NB, 1, H) f32
    w2_ref   : (NB, H, H)  bf16    b2_ref   : (NB, 1, H) f32
    wout_ref : (H, 2*L)    bf16    bout_ref : (1, 2*L) f32
    out_ref  : (TM, 2*L)   f32     (lane-dense [mu | log_var] slab)
    """
    # Input layer + ReLU (MXU matmul, f32 accumulate)
    h = jnp.dot(x_ref[...], win_ref[...], preferred_element_type=jnp.float32)
    h = jnp.maximum(h + bin_ref[...], 0.0)

    # Residual blocks (static unroll — num_blocks is a Python int)
    for i in range(num_blocks):
        t = jnp.dot(h.astype(jnp.bfloat16), w1_ref[i],
                    preferred_element_type=jnp.float32) + b1_ref[i]
        t = jnp.maximum(t, 0.0)
        h = h + jnp.dot(t.astype(jnp.bfloat16), w2_ref[i],
                        preferred_element_type=jnp.float32) + b2_ref[i]

    # Output layer -> single lane-dense params slab [mu | log_var]
    params = jnp.dot(h.astype(jnp.bfloat16), wout_ref[...],
                     preferred_element_type=jnp.float32) + bout_ref[...]
    out_ref[...] = params.astype(out_ref.dtype)


def init_params(key, input_dim, hidden_dim, latent_dim, num_blocks):
    """Deterministic synthetic parameter init. Weights bf16, biases f32."""
    ks = jax.random.split(key, 4)
    out_dim = 2 * latent_dim
    return {
        "w_in": (jax.random.normal(ks[0], (input_dim, hidden_dim), jnp.float32)
                 * (1.0 / jnp.sqrt(input_dim))).astype(jnp.bfloat16),
        "b_in": jnp.zeros((1, hidden_dim), jnp.float32),
        "w1": (jax.random.normal(ks[1], (num_blocks, hidden_dim, hidden_dim),
                                 jnp.float32)
               * (1.0 / jnp.sqrt(hidden_dim))).astype(jnp.bfloat16),
        "b1": jnp.zeros((num_blocks, 1, hidden_dim), jnp.float32),
        "w2": (jax.random.normal(ks[2], (num_blocks, hidden_dim, hidden_dim),
                                 jnp.float32)
               * (1.0 / jnp.sqrt(hidden_dim))).astype(jnp.bfloat16),
        "b2": jnp.zeros((num_blocks, 1, hidden_dim), jnp.float32),
        "w_out": (jax.random.normal(ks[3], (hidden_dim, out_dim), jnp.float32)
                  * (1.0 / jnp.sqrt(hidden_dim))).astype(jnp.bfloat16),
        "b_out": jnp.zeros((1, out_dim), jnp.float32),
    }


@jax.jit
def encoder_forward(x, params):
    B = x.shape[0]
    # Batch tile: full batch if small, otherwise 128-row tiles (v5e-friendly;
    # also fine for v6e/v7x where "parallel" shards tiles across cores).
    TM = B if B < 128 else 128
    assert B % TM == 0, "pad batch to a multiple of the tile for larger B"
    grid = (B // TM,)

    x_bf16 = x.astype(jnp.bfloat16)

    # Weights: full-array blocks whose index_map ignores the batch index so
    # they stay resident in VMEM across all batch tiles.
    def resident(shape):
        return pl.BlockSpec(shape, lambda i: (0,) * len(shape))

    out_params = pl.pallas_call(
        partial(encoder_kernel, num_blocks=NUM_BLOCKS),
        out_shape=jax.ShapeDtypeStruct((B, 2 * LATENT_DIM), jnp.float32),
        grid=grid,
        in_specs=[
            pl.BlockSpec((TM, INPUT_DIM), lambda i: (i, 0)),          # x
            resident(params["w_in"].shape),
            resident(params["b_in"].shape),
            resident(params["w1"].shape),
            resident(params["b1"].shape),
            resident(params["w2"].shape),
            resident(params["b2"].shape),
            resident(params["w_out"].shape),
            resident(params["b_out"].shape),
        ],
        out_specs=pl.BlockSpec((TM, 2 * LATENT_DIM), lambda i: (i, 0)),
        compiler_params=pltpu.CompilerParams(
            dimension_semantics=("parallel",)),
    )(
        x_bf16,
        params["w_in"], params["b_in"],
        params["w1"], params["b1"],
        params["w2"], params["b2"],
        params["w_out"], params["b_out"],
    )

    # Split + exp in the wrapper (cheap XLA ops; avoids the non-128-aligned
    # lane slice and a second narrow masked store inside the kernel).
    mu = out_params[:, :LATENT_DIM]
    s = jnp.exp(0.5 * out_params[:, LATENT_DIM:])
    return mu, s


def encoder_forward_ref(x, params):
    """Pure-JAX reference mirroring the kernel's mixed-precision behavior."""
    h = jnp.dot(x.astype(jnp.bfloat16), params["w_in"],
                preferred_element_type=jnp.float32)
    h = jnp.maximum(h + params["b_in"], 0.0)
    for i in range(NUM_BLOCKS):
        t = jnp.dot(h.astype(jnp.bfloat16), params["w1"][i],
                    preferred_element_type=jnp.float32) + params["b1"][i]
        t = jnp.maximum(t, 0.0)
        h = h + jnp.dot(t.astype(jnp.bfloat16), params["w2"][i],
                        preferred_element_type=jnp.float32) + params["b2"][i]
    p = jnp.dot(h.astype(jnp.bfloat16), params["w_out"],
                preferred_element_type=jnp.float32) + params["b_out"]
    mu, log_var = p[:, :LATENT_DIM], p[:, LATENT_DIM:]
    return mu, jnp.exp(0.5 * log_var)


if __name__ == "__main__":
    key = jax.random.PRNGKey(0)
    k_param, k_x = jax.random.split(key)

    params = init_params(k_param, INPUT_DIM, HIDDEN_DIM, LATENT_DIM, NUM_BLOCKS)
    x = jax.random.normal(k_x, (BATCH, INPUT_DIM), jnp.float32)

    mu, s = encoder_forward(x, params)
    jax.block_until_ready((mu, s))

    mu_ref, s_ref = encoder_forward_ref(x, params)
    assert mu.shape == (BATCH, LATENT_DIM) and s.shape == (BATCH, LATENT_DIM)
    assert jnp.allclose(mu, mu_ref, atol=1e-3, rtol=1e-3), \
        f"mu mismatch: {jnp.max(jnp.abs(mu - mu_ref))}"
    assert jnp.allclose(s, s_ref, atol=1e-3, rtol=1e-3), \
        f"s mismatch: {jnp.max(jnp.abs(s - s_ref))}"

    print("KERNEL_OK")
</pallas_src>

<mosaic_0001>
module attributes {stable_mosaic.version = 11 : i64} {
  func.func @encoder_kernel(%arg0: i32, %arg1: memref<8x32xbf16, #tpu.memory_space<vmem>>, %arg2: memref<32x64xbf16, #tpu.memory_space<vmem>>, %arg3: memref<1x64xf32, #tpu.memory_space<vmem>>, %arg4: memref<3x64x64xbf16, #tpu.memory_space<vmem>>, %arg5: memref<3x1x64xf32, #tpu.memory_space<vmem>>, %arg6: memref<3x64x64xbf16, #tpu.memory_space<vmem>>, %arg7: memref<3x1x64xf32, #tpu.memory_space<vmem>>, %arg8: memref<64x32xbf16, #tpu.memory_space<vmem>>, %arg9: memref<1x32xf32, #tpu.memory_space<vmem>>, %arg10: memref<8x32xf32, #tpu.memory_space<vmem>>) attributes {dimension_semantics = [#tpu.dimension_semantics<parallel>], iteration_bounds = array<i64: 1>, scalar_prefetch = 0 : i64, scratch_operands = 0 : i64, tpu.core_type = #tpu.core_type<tc>, window_params = [{transform_indices = @transform_0, window_bounds = array<i64: 8, 32>}, {pipeline_mode = #tpu.pipeline_mode<synchronous>, transform_indices = @transform_1, window_bounds = array<i64: 32, 64>}, {pipeline_mode = #tpu.pipeline_mode<synchronous>, transform_indices = @transform_2, window_bounds = array<i64: 1, 64>}, {pipeline_mode = #tpu.pipeline_mode<synchronous>, transform_indices = @transform_3, window_bounds = array<i64: 3, 64, 64>}, {pipeline_mode = #tpu.pipeline_mode<synchronous>, transform_indices = @transform_4, window_bounds = array<i64: 3, 1, 64>}, {pipeline_mode = #tpu.pipeline_mode<synchronous>, transform_indices = @transform_5, window_bounds = array<i64: 3, 64, 64>}, {pipeline_mode = #tpu.pipeline_mode<synchronous>, transform_indices = @transform_6, window_bounds = array<i64: 3, 1, 64>}, {pipeline_mode = #tpu.pipeline_mode<synchronous>, transform_indices = @transform_7, window_bounds = array<i64: 64, 32>}, {pipeline_mode = #tpu.pipeline_mode<synchronous>, transform_indices = @transform_8, window_bounds = array<i64: 1, 32>}, {transform_indices = @transform_9, window_bounds = array<i64: 8, 32>}]} {
    %c0 = arith.constant 0 : index
    %c0_0 = arith.constant 0 : index
    %0 = vector.load %arg1[%c0, %c0_0] : memref<8x32xbf16, #tpu.memory_space<vmem>>, vector<8x32xbf16>
    %c0_1 = arith.constant 0 : index
    %c0_2 = arith.constant 0 : index
    %1 = vector.load %arg2[%c0_1, %c0_2] : memref<32x64xbf16, #tpu.memory_space<vmem>>, vector<32x64xbf16>
    %cst = arith.constant dense<0.000000e+00> : vector<8x64xf32>
    %2 = tpu.matmul %0, %1, %cst {dimension_numbers = #tpu.dot_dimension_numbers<[1], [0], [0], [1], [0, 0, 1, 1], [], []>} : vector<8x32xbf16>, vector<32x64xbf16>, vector<8x64xf32> -> vector<8x64xf32>
    %c0_3 = arith.constant 0 : index
    %c0_4 = arith.constant 0 : index
    %3 = vector.load %arg3[%c0_3, %c0_4] : memref<1x64xf32, #tpu.memory_space<vmem>>, vector<1x64xf32>
    %4 = vector.broadcast %3 : vector<1x64xf32> to vector<8x64xf32>
    %5 = arith.addf %2, %4 : vector<8x64xf32>
    %cst_5 = arith.constant 0.000000e+00 : f32
    %6 = vector.broadcast %cst_5 : f32 to vector<8x64xf32>
    %7 = arith.maximumf %5, %6 : vector<8x64xf32>
    %8 = arith.truncf %7 : vector<8x64xf32> to vector<8x64xbf16>
    %c0_6 = arith.constant 0 : index
    %c0_7 = arith.constant 0 : index
    %c0_8 = arith.constant 0 : index
    %9 = vector.load %arg4[%c0_6, %c0_7, %c0_8] : memref<3x64x64xbf16, #tpu.memory_space<vmem>>, vector<1x64x64xbf16>
    %10 = vector.shape_cast %9 : vector<1x64x64xbf16> to vector<64x64xbf16>
    %cst_9 = arith.constant dense<0.000000e+00> : vector<8x64xf32>
    %11 = tpu.matmul %8, %10, %cst_9 {dimension_numbers = #tpu.dot_dimension_numbers<[1], [0], [0], [1], [0, 0, 1, 1], [], []>} : vector<8x64xbf16>, vector<64x64xbf16>, vector<8x64xf32> -> vector<8x64xf32>
    %c0_10 = arith.constant 0 : index
    %c0_11 = arith.constant 0 : index
    %c0_12 = arith.constant 0 : index
    %12 = vector.load %arg5[%c0_10, %c0_11, %c0_12] : memref<3x1x64xf32, #tpu.memory_space<vmem>>, vector<1x1x64xf32>
    %13 = vector.shape_cast %12 : vector<1x1x64xf32> to vector<1x64xf32>
    %14 = vector.broadcast %13 : vector<1x64xf32> to vector<8x64xf32>
    %15 = arith.addf %11, %14 : vector<8x64xf32>
    %cst_13 = arith.constant 0.000000e+00 : f32
    %16 = vector.broadcast %cst_13 : f32 to vector<8x64xf32>
    %17 = arith.maximumf %15, %16 : vector<8x64xf32>
    %18 = arith.truncf %17 : vector<8x64xf32> to vector<8x64xbf16>
    %c0_14 = arith.constant 0 : index
    %c0_15 = arith.constant 0 : index
    %c0_16 = arith.constant 0 : index
    %19 = vector.load %arg6[%c0_14, %c0_15, %c0_16] : memref<3x64x64xbf16, #tpu.memory_space<vmem>>, vector<1x64x64xbf16>
    %20 = vector.shape_cast %19 : vector<1x64x64xbf16> to vector<64x64xbf16>
    %cst_17 = arith.constant dense<0.000000e+00> : vector<8x64xf32>
    %21 = tpu.matmul %18, %20, %cst_17 {dimension_numbers = #tpu.dot_dimension_numbers<[1], [0], [0], [1], [0, 0, 1, 1], [], []>} : vector<8x64xbf16>, vector<64x64xbf16>, vector<8x64xf32> -> vector<8x64xf32>
    %22 = arith.addf %7, %21 : vector<8x64xf32>
    %c0_18 = arith.constant 0 : index
    %c0_19 = arith.constant 0 : index
    %c0_20 = arith.constant 0 : index
    %23 = vector.load %arg7[%c0_18, %c0_19, %c0_20] : memref<3x1x64xf32, #tpu.memory_space<vmem>>, vector<1x1x64xf32>
    %24 = vector.shape_cast %23 : vector<1x1x64xf32> to vector<1x64xf32>
    %25 = vector.broadcast %24 : vector<1x64xf32> to vector<8x64xf32>
    %26 = arith.addf %22, %25 : vector<8x64xf32>
    %27 = arith.truncf %26 : vector<8x64xf32> to vector<8x64xbf16>
    %c1 = arith.constant 1 : index
    %c0_21 = arith.constant 0 : index
    %c0_22 = arith.constant 0 : index
    %28 = vector.load %arg4[%c1, %c0_21, %c0_22] : memref<3x64x64xbf16, #tpu.memory_space<vmem>>, vector<1x64x64xbf16>
    %29 = vector.shape_cast %28 : vector<1x64x64xbf16> to vector<64x64xbf16>
    %cst_23 = arith.constant dense<0.000000e+00> : vector<8x64xf32>
    %30 = tpu.matmul %27, %29, %cst_23 {dimension_numbers = #tpu.dot_dimension_numbers<[1], [0], [0], [1], [0, 0, 1, 1], [], []>} : vector<8x64xbf16>, vector<64x64xbf16>, vector<8x64xf32> -> vector<8x64xf32>
    %c1_24 = arith.constant 1 : index
    %c0_25 = arith.constant 0 : index
    %c0_26 = arith.constant 0 : index
    %31 = vector.load %arg5[%c1_24, %c0_25, %c0_26] : memref<3x1x64xf32, #tpu.memory_space<vmem>>, vector<1x1x64xf32>
    %32 = vector.shape_cast %31 : vector<1x1x64xf32> to vector<1x64xf32>
    %33 = vector.broadcast %32 : vector<1x64xf32> to vector<8x64xf32>
    %34 = arith.addf %30, %33 : vector<8x64xf32>
    %cst_27 = arith.constant 0.000000e+00 : f32
    %35 = vector.broadcast %cst_27 : f32 to vector<8x64xf32>
    %36 = arith.maximumf %34, %35 : vector<8x64xf32>
    %37 = arith.truncf %36 : vector<8x64xf32> to vector<8x64xbf16>
    %c1_28 = arith.constant 1 : index
    %c0_29 = arith.constant 0 : index
    %c0_30 = arith.constant 0 : index
    %38 = vector.load %arg6[%c1_28, %c0_29, %c0_30] : memref<3x64x64xbf16, #tpu.memory_space<vmem>>, vector<1x64x64xbf16>
    %39 = vector.shape_cast %38 : vector<1x64x64xbf16> to vector<64x64xbf16>
    %cst_31 = arith.constant dense<0.000000e+00> : vector<8x64xf32>
    %40 = tpu.matmul %37, %39, %cst_31 {dimension_numbers = #tpu.dot_dimension_numbers<[1], [0], [0], [1], [0, 0, 1, 1], [], []>} : vector<8x64xbf16>, vector<64x64xbf16>, vector<8x64xf32> -> vector<8x64xf32>
    %41 = arith.addf %26, %40 : vector<8x64xf32>
    %c1_32 = arith.constant 1 : index
    %c0_33 = arith.constant 0 : index
    %c0_34 = arith.constant 0 : index
    %42 = vector.load %arg7[%c1_32, %c0_33, %c0_34] : memref<3x1x64xf32, #tpu.memory_space<vmem>>, vector<1x1x64xf32>
    %43 = vector.shape_cast %42 : vector<1x1x64xf32> to vector<1x64xf32>
    %44 = vector.broadcast %43 : vector<1x64xf32> to vector<8x64xf32>
    %45 = arith.addf %41, %44 : vector<8x64xf32>
    %46 = arith.truncf %45 : vector<8x64xf32> to vector<8x64xbf16>
    %c2 = arith.constant 2 : index
    %c0_35 = arith.constant 0 : index
    %c0_36 = arith.constant 0 : index
    %47 = vector.load %arg4[%c2, %c0_35, %c0_36] : memref<3x64x64xbf16, #tpu.memory_space<vmem>>, vector<1x64x64xbf16>
    %48 = vector.shape_cast %47 : vector<1x64x64xbf16> to vector<64x64xbf16>
    %cst_37 = arith.constant dense<0.000000e+00> : vector<8x64xf32>
    %49 = tpu.matmul %46, %48, %cst_37 {dimension_numbers = #tpu.dot_dimension_numbers<[1], [0], [0], [1], [0, 0, 1, 1], [], []>} : vector<8x64xbf16>, vector<64x64xbf16>, vector<8x64xf32> -> vector<8x64xf32>
    %c2_38 = arith.constant 2 : index
    %c0_39 = arith.constant 0 : index
    %c0_40 = arith.constant 0 : index
    %50 = vector.load %arg5[%c2_38, %c0_39, %c0_40] : memref<3x1x64xf32, #tpu.memory_space<vmem>>, vector<1x1x64xf32>
    %51 = vector.shape_cast %50 : vector<1x1x64xf32> to vector<1x64xf32>
    %52 = vector.broadcast %51 : vector<1x64xf32> to vector<8x64xf32>
    %53 = arith.addf %49, %52 : vector<8x64xf32>
    %cst_41 = arith.constant 0.000000e+00 : f32
    %54 = vector.broadcast %cst_41 : f32 to vector<8x64xf32>
    %55 = arith.maximumf %53, %54 : vector<8x64xf32>
    %56 = arith.truncf %55 : vector<8x64xf32> to vector<8x64xbf16>
    %c2_42 = arith.constant 2 : index
    %c0_43 = arith.constant 0 : index
    %c0_44 = arith.constant 0 : index
    %57 = vector.load %arg6[%c2_42, %c0_43, %c0_44] : memref<3x64x64xbf16, #tpu.memory_space<vmem>>, vector<1x64x64xbf16>
    %58 = vector.shape_cast %57 : vector<1x64x64xbf16> to vector<64x64xbf16>
    %cst_45 = arith.constant dense<0.000000e+00> : vector<8x64xf32>
    %59 = tpu.matmul %56, %58, %cst_45 {dimension_numbers = #tpu.dot_dimension_numbers<[1], [0], [0], [1], [0, 0, 1, 1], [], []>} : vector<8x64xbf16>, vector<64x64xbf16>, vector<8x64xf32> -> vector<8x64xf32>
    %60 = arith.addf %45, %59 : vector<8x64xf32>
    %c2_46 = arith.constant 2 : index
    %c0_47 = arith.constant 0 : index
    %c0_48 = arith.constant 0 : index
    %61 = vector.load %arg7[%c2_46, %c0_47, %c0_48] : memref<3x1x64xf32, #tpu.memory_space<vmem>>, vector<1x1x64xf32>
    %62 = vector.shape_cast %61 : vector<1x1x64xf32> to vector<1x64xf32>
    %63 = vector.broadcast %62 : vector<1x64xf32> to vector<8x64xf32>
    %64 = arith.addf %60, %63 : vector<8x64xf32>
    %65 = arith.truncf %64 : vector<8x64xf32> to vector<8x64xbf16>
    %c0_49 = arith.constant 0 : index
    %c0_50 = arith.constant 0 : index
    %66 = vector.load %arg8[%c0_49, %c0_50] : memref<64x32xbf16, #tpu.memory_space<vmem>>, vector<64x32xbf16>
    %cst_51 = arith.constant dense<0.000000e+00> : vector<8x32xf32>
    %67 = tpu.matmul %65, %66, %cst_51 {dimension_numbers = #tpu.dot_dimension_numbers<[1], [0], [0], [1], [0, 0, 1, 1], [], []>} : vector<8x64xbf16>, vector<64x32xbf16>, vector<8x32xf32> -> vector<8x32xf32>
    %c0_52 = arith.constant 0 : index
    %c0_53 = arith.constant 0 : index
    %68 = vector.load %arg9[%c0_52, %c0_53] : memref<1x32xf32, #tpu.memory_space<vmem>>, vector<1x32xf32>
    %69 = vector.broadcast %68 : vector<1x32xf32> to vector<8x32xf32>
    %70 = arith.addf %67, %69 : vector<8x32xf32>
    %c0_54 = arith.constant 0 : index
    %c0_55 = arith.constant 0 : index
    %71 = vector.load %arg10[%c0_54, %c0_55] : memref<8x32xf32, #tpu.memory_space<vmem>>, vector<8x32xf32>
    tpu.vector_store %arg10[%c0_54, %c0_55], %70 {strides = array<i32>} : memref<8x32xf32, #tpu.memory_space<vmem>>, vector<8x32xf32>,
    return
  }
  func.func @transform_0(%arg0: i32) -> (i32, i32) {
    %c0_i32 = arith.constant 0 : i32
    %c0_i32_0 = arith.constant 0 : i32
    return %arg0, %c0_i32 : i32, i32
  }
  func.func @transform_1(%arg0: i32) -> (i32, i32) {
    %c0_i32 = arith.constant 0 : i32
    %c0_i32_0 = arith.constant 0 : i32
    %c0_i32_1 = arith.constant 0 : i32
    return %c0_i32, %c0_i32_0 : i32, i32
  }
  func.func @transform_2(%arg0: i32) -> (i32, i32) {
    %c0_i32 = arith.constant 0 : i32
    %c0_i32_0 = arith.constant 0 : i32
    %c0_i32_1 = arith.constant 0 : i32
    return %c0_i32, %c0_i32_0 : i32, i32
  }
  func.func @transform_3(%arg0: i32) -> (i32, i32, i32) {
    %c0_i32 = arith.constant 0 : i32
    %c0_i32_0 = arith.constant 0 : i32
    %c0_i32_1 = arith.constant 0 : i32
    %c0_i32_2 = arith.constant 0 : i32
    return %c0_i32, %c0_i32_0, %c0_i32_1 : i32, i32, i32
  }
  func.func @transform_4(%arg0: i32) -> (i32, i32, i32) {
    %c0_i32 = arith.constant 0 : i32
    %c0_i32_0 = arith.constant 0 : i32
    %c0_i32_1 = arith.constant 0 : i32
    %c0_i32_2 = arith.constant 0 : i32
    return %c0_i32, %c0_i32_0, %c0_i32_1 : i32, i32, i32
  }
  func.func @transform_5(%arg0: i32) -> (i32, i32, i32) {
    %c0_i32 = arith.constant 0 : i32
    %c0_i32_0 = arith.constant 0 : i32
    %c0_i32_1 = arith.constant 0 : i32
    %c0_i32_2 = arith.constant 0 : i32
    return %c0_i32, %c0_i32_0, %c0_i32_1 : i32, i32, i32
  }
  func.func @transform_6(%arg0: i32) -> (i32, i32, i32) {
    %c0_i32 = arith.constant 0 : i32
    %c0_i32_0 = arith.constant 0 : i32
    %c0_i32_1 = arith.constant 0 : i32
    %c0_i32_2 = arith.constant 0 : i32
    return %c0_i32, %c0_i32_0, %c0_i32_1 : i32, i32, i32
  }
  func.func @transform_7(%arg0: i32) -> (i32, i32) {
    %c0_i32 = arith.constant 0 : i32
    %c0_i32_0 = arith.constant 0 : i32
    %c0_i32_1 = arith.constant 0 : i32
    return %c0_i32, %c0_i32_0 : i32, i32
  }
  func.func @transform_8(%arg0: i32) -> (i32, i32) {
    %c0_i32 = arith.constant 0 : i32
    %c0_i32_0 = arith.constant 0 : i32
    %c0_i32_1 = arith.constant 0 : i32
    return %c0_i32, %c0_i32_0 : i32, i32
  }
  func.func @transform_9(%arg0: i32) -> (i32, i32) {
    %c0_i32 = arith.constant 0 : i32
    %c0_i32_0 = arith.constant 0 : i32
    return %arg0, %c0_i32 : i32, i32
  }
}

</mosaic_0001>

<llo_original>
// kernel: encoder_forward.1
$region0: #{encoder_forward.1}
  #allocation0 [shape = 'u32[]', space=smem, size = 0x4, offset = 0x4, fixed_abs, tag = 'smem constant byte address 0x4 - core index']
  #allocation1 [shape = 'u32[144,128]{1,0:T(1,128)}', space=vmem, size = 0x12000, scoped, tag = 'internal scratch']
  %s0 = inlined_call_operand.vmem [shape: bf16[8,32], index: 0, kind: input, shape index: {}]
  %s1 = inlined_call_operand.vmem [shape: bf16[32,64], index: 1, kind: input, shape index: {}]
  %s2 = inlined_call_operand.vmem [shape: f32[1,64], index: 2, kind: input, shape index: {}]
  %s3 = inlined_call_operand.hbm [shape: bf16[3,64,64], index: 3, kind: input, shape index: {}]
  %s4 = inlined_call_operand.vmem [shape: f32[3,1,64], index: 4, kind: input, shape index: {}]
  %s5 = inlined_call_operand.hbm [shape: bf16[3,64,64], index: 5, kind: input, shape index: {}]
  %s6 = inlined_call_operand.vmem [shape: f32[3,1,64], index: 6, kind: input, shape index: {}]
  %s7 = inlined_call_operand.vmem [shape: bf16[64,32], index: 7, kind: input, shape index: {}]
  %s8 = inlined_call_operand.vmem [shape: f32[1,32], index: 8, kind: input, shape index: {}]
  %s9 = inlined_call_operand.vmem [shape: f32[8,32], index: 9, kind: output, shape index: {}]
  %s10 = sld [smem:[#allocation0]]
  $region54: #{encoder_forward.1} parent=0
    _
  %s12 = ssub.s32 1, %s10
  %s13 = scalar_select 0, %s12, %s10
  $region1: #{encoder_forward.1} parent=0
    #allocation2 [shape = 'u8[49152]{0}', space=vmem, size = 0xc000, scoped, tag = 'input window, operand 3, single buffered']
    #allocation3 [shape = 's32[1]{0}', space=sflag, size = 0x4, scoped, tag = 'scoped memory for encoder_forward.1']
    #allocation4 [shape = 'u8[49152]{0}', space=vmem, size = 0xc000, scoped, tag = 'input window, operand 5, single buffered']
    #allocation5 [shape = 's32[1]{0}', space=sflag, size = 0x4, scoped, tag = 'scoped memory for encoder_forward.1']
    %14 = vsyncpa [#allocation3], 0
    %15 = vsyncpa [#allocation5], 0
    // Predicated region
    $region2: #{encoder_forward.1} parent=1 // pred_check
      _
    $region3: #{encoder_forward.1} parent=1 // pred_check_branch
      %17 = sbr.rel (0) target = $region5
    $region4: #{encoder_forward.1} parent=1 // pred_region
      _
    $region5: #{encoder_forward.1} parent=1 // pred_fallthru
      _
    // Predicated region
    $region6: #{encoder_forward.1} parent=1 // pred_check
      _
    $region7: #{encoder_forward.1} parent=1 // pred_check_branch
      %19 = sbr.rel (0) target = $region9
    $region8: #{encoder_forward.1} parent=1 // pred_region
      _
    $region9: #{encoder_forward.1} parent=1 // pred_fallthru
      _
    // Predicated region
    $region10: #{encoder_forward.1} parent=1 // pred_check
      _
    $region11: #{encoder_forward.1} parent=1 // pred_check_branch
      %21 = sbr.rel (0) target = $region13
    $region12: #{encoder_forward.1} parent=1 // pred_region
      _
    $region13: #{encoder_forward.1} parent=1 // pred_fallthru
      _
    // Predicated region
    $region14: #{encoder_forward.1} parent=1 // pred_check
      _
    $region15: #{encoder_forward.1} parent=1 // pred_check_branch
      %23 = sbr.rel (0) target = $region17
    $region16: #{encoder_forward.1} parent=1 // pred_region
      %s25 = ssub.s32 1536, 1536
      %26 = vsyncadd [#allocation3], %s25
      %s27 = sshll.u32 [#allocation2], 4
      %s28 = int_to_ptr.vmem [resolvable:$true] %s27
      %33 = dma.hbm_to_vmem [thread:$0]  %s3, 1536, %s28, [#allocation3], 64, 64, 4
    $region17: #{encoder_forward.1} parent=1 // pred_fallthru
      _
    // Predicated region
    $region18: #{encoder_forward.1} parent=1 // pred_check
      _
    $region19: #{encoder_forward.1} parent=1 // pred_check_branch
      %35 = sbr.rel (0) target = $region21
    $region20: #{encoder_forward.1} parent=1 // pred_region
      _
    $region21: #{encoder_forward.1} parent=1 // pred_fallthru
      _
    // Predicated region
    $region22: #{encoder_forward.1} parent=1 // pred_check
      _
    $region23: #{encoder_forward.1} parent=1 // pred_check_branch
      %37 = sbr.rel (0) target = $region25
    $region24: #{encoder_forward.1} parent=1 // pred_region
      %s39 = ssub.s32 1536, 1536
      %40 = vsyncadd [#allocation5], %s39
      %s41 = sshll.u32 [#allocation4], 4
      %s42 = int_to_ptr.vmem [resolvable:$true] %s41
      %47 = dma.hbm_to_vmem [thread:$0]  %s5, 1536, %s42, [#allocation5], 64, 64, 4
    $region25: #{encoder_forward.1} parent=1 // pred_fallthru
      _
    // Predicated region
    $region26: #{encoder_forward.1} parent=1 // pred_check
      _
    $region27: #{encoder_forward.1} parent=1 // pred_check_branch
      %49 = sbr.rel (0) target = $region29
    $region28: #{encoder_forward.1} parent=1 // pred_region
      _
    $region29: #{encoder_forward.1} parent=1 // pred_fallthru
      _
    // Predicated region
    $region30: #{encoder_forward.1} parent=1 // pred_check
      _
    $region31: #{encoder_forward.1} parent=1 // pred_check_branch
      %51 = sbr.rel (0) target = $region33
    $region32: #{encoder_forward.1} parent=1 // pred_region
      _
    $region33: #{encoder_forward.1} parent=1 // pred_fallthru
      _
    // Predicated region
    $region34: #{encoder_forward.1} parent=1 // pred_check
      _
    $region35: #{encoder_forward.1} parent=1 // pred_check_branch
      %53 = sbr.rel (0) target = $region37
    $region36: #{encoder_forward.1} parent=1 // pred_region
      _
    $region37: #{encoder_forward.1} parent=1 // pred_fallthru
      _
    // Predicated region
    $region38: #{encoder_forward.1} parent=1 // pred_check
      _
    $region39: #{encoder_forward.1} parent=1 // pred_check_branch
      %55 = sbr.rel (0) target = $region41
    $region40: #{encoder_forward.1} parent=1 // pred_region
      %56 = dma.done [#allocation3], 1536
    $region41: #{encoder_forward.1} parent=1 // pred_fallthru
      _
    // Predicated region
    $region42: #{encoder_forward.1} parent=1 // pred_check
      _
    $region43: #{encoder_forward.1} parent=1 // pred_check_branch
      %58 = sbr.rel (0) target = $region45
    $region44: #{encoder_forward.1} parent=1 // pred_region
      %59 = dma.done [#allocation5], 1536
    $region45: #{encoder_forward.1} parent=1 // pred_fallthru
      _
    %v61 = vld [vmem:[%s0] sm:$0xf]
    %v62 = vld [vmem:[%s1] sm:$0xf]
    %v63 = vld [vmem:[%s1 + $0x4] sm:$0xf]
    %v64 = vld [vmem:[%s1 + $0x8] sm:$0xf]
    %v65 = vld [vmem:[%s1 + $0xc] sm:$0xf]
    %v66 = vld [vmem:[%s2] sm:$0x1]
    %v68 = vlaneseq
    %v69 = vshrl.u32 %v68, 7
    %v70 = vsub.s32 0, %v69
    %v71 = vrot.slane %v66, %v70
    %v77 = vunpack.c.l.b16 %v62
    %v78 = vunpack.c.l.b16 %v63
    %v79 = vunpack.c.l.b16 %v64
    %v80 = vunpack.c.l.b16 %v65
    %v81 = vpack.c.b16 %v78, %v77
    %v82 = vpack.c.b16 %v80, %v79
    %vm85 = vcmask 261120
    %v87 = vsel %vm85, %v61, 0
    %89 = vmatprep.subr.bf16.mxu0 0
    %90 = vmatpush1.bf16.msra.mxu0 0
    %91 = vmatprep.subr.bf16.mxu0 0
    %92 = vmatpush1.bf16.msra.mxu0 0
    %93 = vmatprep.subr.bf16.mxu0 0
    %94 = vmatpush1.bf16.msra.mxu0 0
    %95 = vmatprep.subr.bf16.mxu0 0
    %96 = vmatpush1.bf16.msra.mxu0 0
    %97 = vmatprep.subr.bf16.mxu0 0
    %98 = vmatpush1.bf16.msra.mxu0 0
    %99 = vmatprep.subr.bf16.mxu0 0
    %100 = vmatpush1.bf16.msra.mxu0 0
    %101 = vmatprep.subr.bf16.mxu0 0
    %102 = vmatpush1.bf16.msra.mxu0 %v82
    %103 = vmatprep.subr.bf16.mxu0 0
    %104 = vmatpush1.bf16.msra.mxu0 %v81
    %105 = vmatprep.subr.bf16.mxu0 0
    %106 = vmatpush2.bf16.msra.mxu0 0
    %107 = vmatprep.subr.bf16.mxu0 0
    %108 = vmatpush2.bf16.msra.mxu0 0
    %109 = vmatprep.subr.bf16.mxu0 0
    %110 = vmatpush2.bf16.msra.mxu0 0
    %111 = vmatprep.subr.bf16.mxu0 0
    %112 = vmatpush2.bf16.msra.mxu0 0
    %113 = vmatprep.subr.bf16.mxu0 0
    %114 = vmatpush2.bf16.msra.mxu0 0
    %115 = vmatprep.subr.bf16.mxu0 0
    %116 = vmatpush2.bf16.msra.mxu0 0
    %117 = vmatprep.subr.bf16.mxu0 0
    %118 = vmatpush2.bf16.msra.mxu0 0
    %119 = vmatprep.subr.bf16.mxu0 0
    %120 = vmatpush2.bf16.msra.mxu0 0
    %121 = vmatprep.mubr.bf16.mxu0 0
    %122 = vmatmul.mubr.bf16.gmra.mxu0 %v87
    %v123 = vpop.f32.mrf.mxu0
    %v124 = vadd.f32 %v71, %v123
    %v125 = vpop.f32.mrf.mxu0
    %v126 = vpop.f32.mrf.mxu0
    %v127 = vpop.f32.mrf.mxu0
    %128 = vdwg.mxu0
    %v129 = vmax.f32 %v124, 0.0
    %v130 = vpack.c.bf16 %v129, %v129
    %v131 = vld [vmem:[#allocation2] sm:$0xf]
    %v132 = vld [vmem:[#allocation2 + $0x4] sm:$0xf]
    %v133 = vld [vmem:[#allocation2 + $0x8] sm:$0xf]
    %v134 = vld [vmem:[#allocation2 + $0xc] sm:$0xf]
    %v135 = vld [vmem:[#allocation2 + $0x10] sm:$0xf]
    %v136 = vld [vmem:[#allocation2 + $0x14] sm:$0xf]
    %v137 = vld [vmem:[#allocation2 + $0x18] sm:$0xf]
    %v138 = vld [vmem:[#allocation2 + $0x1c] sm:$0xf]
    %v139 = vld [vmem:[%s4] sm:$0x1]
    %v141 = vlaneseq
    %v142 = vshrl.u32 %v141, 7
    %v143 = vsub.s32 0, %v142
    %v144 = vrot.slane %v139, %v143
    %v154 = vunpack.c.l.b16 %v131
    %v155 = vunpack.c.l.b16 %v132
    %v156 = vunpack.c.l.b16 %v133
    %v157 = vunpack.c.l.b16 %v134
    %v158 = vunpack.c.l.b16 %v135
    %v159 = vunpack.c.l.b16 %v136
    %v160 = vunpack.c.l.b16 %v137
    %v161 = vunpack.c.l.b16 %v138
    %v162 = vpack.c.b16 %v155, %v154
    %v163 = vpack.c.b16 %v157, %v156
    %v164 = vpack.c.b16 %v159, %v158
    %v165 = vpack.c.b16 %v161, %v160
    %vm170 = vcmask 523264
    %v172 = vsel %vm170, %v130, 0
    %174 = vmatprep.subr.bf16.mxu0 0
    %175 = vmatpush1.bf16.msra.mxu0 0
    %176 = vmatprep.subr.bf16.mxu0 0
    %177 = vmatpush1.bf16.msra.mxu0 0
    %178 = vmatprep.subr.bf16.mxu0 0
    %179 = vmatpush1.bf16.msra.mxu0 0
    %180 = vmatprep.subr.bf16.mxu0 0
    %181 = vmatpush1.bf16.msra.mxu0 0
    %182 = vmatprep.subr.bf16.mxu0 0
    %183 = vmatpush1.bf16.msra.mxu0 %v165
    %184 = vmatprep.subr.bf16.mxu0 0
    %185 = vmatpush1.bf16.msra.mxu0 %v164
    %186 = vmatprep.subr.bf16.mxu0 0
    %187 = vmatpush1.bf16.msra.mxu0 %v163
    %188 = vmatprep.subr.bf16.mxu0 0
    %189 = vmatpush1.bf16.msra.mxu0 %v162
    %190 = vmatprep.subr.bf16.mxu0 0
    %191 = vmatpush2.bf16.msra.mxu0 0
    %192 = vmatprep.subr.bf16.mxu0 0
    %193 = vmatpush2.bf16.msra.mxu0 0
    %194 = vmatprep.subr.bf16.mxu0 0
    %195 = vmatpush2.bf16.msra.mxu0 0
    %196 = vmatprep.subr.bf16.mxu0 0
    %197 = vmatpush2.bf16.msra.mxu0 0
    %198 = vmatprep.subr.bf16.mxu0 0
    %199 = vmatpush2.bf16.msra.mxu0 0
    %200 = vmatprep.subr.bf16.mxu0 0
    %201 = vmatpush2.bf16.msra.mxu0 0
    %202 = vmatprep.subr.bf16.mxu0 0
    %203 = vmatpush2.bf16.msra.mxu0 0
    %204 = vmatprep.subr.bf16.mxu0 0
    %205 = vmatpush2.bf16.msra.mxu0 0
    %206 = vmatprep.mubr.bf16.mxu0 0
    %207 = vmatmul.mubr.bf16.gmra.mxu0 %v172
    %v208 = vpop.f32.mrf.mxu0
    %v209 = vadd.f32 %v144, %v208
    %v210 = vpop.f32.mrf.mxu0
    %v211 = vpop.f32.mrf.mxu0
    %v212 = vpop.f32.mrf.mxu0
    %213 = vdwg.mxu0
    %v214 = vmax.f32 %v209, 0.0
    %v215 = vpack.c.bf16 %v214, %v214
    %v216 = vld [vmem:[#allocation4] sm:$0xf]
    %v217 = vld [vmem:[#allocation4 + $0x4] sm:$0xf]
    %v218 = vld [vmem:[#allocation4 + $0x8] sm:$0xf]
    %v219 = vld [vmem:[#allocation4 + $0xc] sm:$0xf]
    %v220 = vld [vmem:[#allocation4 + $0x10] sm:$0xf]
    %v221 = vld [vmem:[#allocation4 + $0x14] sm:$0xf]
    %v222 = vld [vmem:[#allocation4 + $0x18] sm:$0xf]
    %v223 = vld [vmem:[#allocation4 + $0x1c] sm:$0xf]
    %v232 = vunpack.c.l.b16 %v216
    %v233 = vunpack.c.l.b16 %v217
    %v234 = vunpack.c.l.b16 %v218
    %v235 = vunpack.c.l.b16 %v219
    %v236 = vunpack.c.l.b16 %v220
    %v237 = vunpack.c.l.b16 %v221
    %v238 = vunpack.c.l.b16 %v222
    %v239 = vunpack.c.l.b16 %v223
    %v240 = vpack.c.b16 %v233, %v232
    %v241 = vpack.c.b16 %v235, %v234
    %v242 = vpack.c.b16 %v237, %v236
    %v243 = vpack.c.b16 %v239, %v238
    %v249 = vsel %vm170, %v215, 0
    %251 = vmatprep.subr.bf16.mxu0 0
    %252 = vmatpush1.bf16.msra.mxu0 0
    %253 = vmatprep.subr.bf16.mxu0 0
    %254 = vmatpush1.bf16.msra.mxu0 0
    %255 = vmatprep.subr.bf16.mxu0 0
    %256 = vmatpush1.bf16.msra.mxu0 0
    %257 = vmatprep.subr.bf16.mxu0 0
    %258 = vmatpush1.bf16.msra.mxu0 0
    %259 = vmatprep.subr.bf16.mxu0 0
    %260 = vmatpush1.bf16.msra.mxu0 %v243
    %261 = vmatprep.subr.bf16.mxu0 0
    %262 = vmatpush1.bf16.msra.mxu0 %v242
    %263 = vmatprep.subr.bf16.mxu0 0
    %264 = vmatpush1.bf16.msra.mxu0 %v241
    %265 = vmatprep.subr.bf16.mxu0 0
    %266 = vmatpush1.bf16.msra.mxu0 %v240
    %267 = vmatprep.subr.bf16.mxu0 0
    %268 = vmatpush2.bf16.msra.mxu0 0
    %269 = vmatprep.subr.bf16.mxu0 0
    %270 = vmatpush2.bf16.msra.mxu0 0
    %271 = vmatprep.subr.bf16.mxu0 0
    %272 = vmatpush2.bf16.msra.mxu0 0
    %273 = vmatprep.subr.bf16.mxu0 0
    %274 = vmatpush2.bf16.msra.mxu0 0
    %275 = vmatprep.subr.bf16.mxu0 0
    %276 = vmatpush2.bf16.msra.mxu0 0
    %277 = vmatprep.subr.bf16.mxu0 0
    %278 = vmatpush2.bf16.msra.mxu0 0
    %279 = vmatprep.subr.bf16.mxu0 0
    %280 = vmatpush2.bf16.msra.mxu0 0
    %281 = vmatprep.subr.bf16.mxu0 0
    %282 = vmatpush2.bf16.msra.mxu0 0
    %283 = vmatprep.mubr.bf16.mxu0 0
    %284 = vmatmul.mubr.bf16.gmra.mxu0 %v249
    %v285 = vpop.f32.mrf.mxu0
    %v286 = vadd.f32 0.0, %v285
    %v287 = vpop.f32.mrf.mxu0
    %v288 = vpop.f32.mrf.mxu0
    %v289 = vpop.f32.mrf.mxu0
    %290 = vdwg.mxu0
    %v291 = vadd.f32 %v129, %v286
    %v292 = vld [vmem:[%s6] sm:$0x1]
    %v294 = vlaneseq
    %v295 = vshrl.u32 %v294, 7
    %v296 = vsub.s32 0, %v295
    %v297 = vrot.slane %v292, %v296
    %v299 = vadd.f32 %v291, %v297
    %v300 = vpack.c.bf16 %v299, %v299
    %s301 = scalar_lea.vmem [#allocation2], 32
    %v302 = vld [vmem:[%s301] sm:$0xf]
    %v303 = vld [vmem:[%s301 + $0x4] sm:$0xf]
    %v304 = vld [vmem:[%s301 + $0x8] sm:$0xf]
    %v305 = vld [vmem:[%s301 + $0xc] sm:$0xf]
    %v306 = vld [vmem:[%s301 + $0x10] sm:$0xf]
    %v307 = vld [vmem:[%s301 + $0x14] sm:$0xf]
    %v308 = vld [vmem:[%s301 + $0x18] sm:$0xf]
    %v309 = vld [vmem:[%s301 + $0x1c] sm:$0xf]
    %s310 = scalar_lea.vmem %s4, 1
    %v311 = vld [vmem:[%s310] sm:$0x1]
    %v313 = vlaneseq
    %v314 = vshrl.u32 %v313, 7
    %v315 = vsub.s32 0, %v314
    %v316 = vrot.slane %v311, %v315
    %v326 = vunpack.c.l.b16 %v302
    %v327 = vunpack.c.l.b16 %v303
    %v328 = vunpack.c.l.b16 %v304
    %v329 = vunpack.c.l.b16 %v305
    %v330 = vunpack.c.l.b16 %v306
    %v331 = vunpack.c.l.b16 %v307
    %v332 = vunpack.c.l.b16 %v308
    %v333 = vunpack.c.l.b16 %v309
    %v334 = vpack.c.b16 %v327, %v326
    %v335 = vpack.c.b16 %v329, %v328
    %v336 = vpack.c.b16 %v331, %v330
    %v337 = vpack.c.b16 %v333, %v332
    %v343 = vsel %vm170, %v300, 0
    %345 = vmatprep.subr.bf16.mxu0 0
    %346 = vmatpush1.bf16.msra.mxu0 0
    %347 = vmatprep.subr.bf16.mxu0 0
    %348 = vmatpush1.bf16.msra.mxu0 0
    %349 = vmatprep.subr.bf16.mxu0 0
    %350 = vmatpush1.bf16.msra.mxu0 0
    %351 = vmatprep.subr.bf16.mxu0 0
    %352 = vmatpush1.bf16.msra.mxu0 0
    %353 = vmatprep.subr.bf16.mxu0 0
    %354 = vmatpush1.bf16.msra.mxu0 %v337
    %355 = vmatprep.subr.bf16.mxu0 0
    %356 = vmatpush1.bf16.msra.mxu0 %v336
    %357 = vmatprep.subr.bf16.mxu0 0
    %358 = vmatpush1.bf16.msra.mxu0 %v335
    %359 = vmatprep.subr.bf16.mxu0 0
    %360 = vmatpush1.bf16.msra.mxu0 %v334
    %361 = vmatprep.subr.bf16.mxu0 0
    %362 = vmatpush2.bf16.msra.mxu0 0
    %363 = vmatprep.subr.bf16.mxu0 0
    %364 = vmatpush2.bf16.msra.mxu0 0
    %365 = vmatprep.subr.bf16.mxu0 0
    %366 = vmatpush2.bf16.msra.mxu0 0
    %367 = vmatprep.subr.bf16.mxu0 0
    %368 = vmatpush2.bf16.msra.mxu0 0
    %369 = vmatprep.subr.bf16.mxu0 0
    %370 = vmatpush2.bf16.msra.mxu0 0
    %371 = vmatprep.subr.bf16.mxu0 0
    %372 = vmatpush2.bf16.msra.mxu0 0
    %373 = vmatprep.subr.bf16.mxu0 0
    %374 = vmatpush2.bf16.msra.mxu0 0
    %375 = vmatprep.subr.bf16.mxu0 0
    %376 = vmatpush2.bf16.msra.mxu0 0
    %377 = vmatprep.mubr.bf16.mxu0 0
    %378 = vmatmul.mubr.bf16.gmra.mxu0 %v343
    %v379 = vpop.f32.mrf.mxu0
    %v380 = vadd.f32 %v316, %v379
    %v381 = vpop.f32.mrf.mxu0
    %v382 = vpop.f32.mrf.mxu0
    %v383 = vpop.f32.mrf.mxu0
    %384 = vdwg.mxu0
    %v385 = vmax.f32 %v380, 0.0
    %v386 = vpack.c.bf16 %v385, %v385
    %s387 = scalar_lea.vmem [#allocation4], 32
    %v388 = vld [vmem:[%s387] sm:$0xf]
    %v389 = vld [vmem:[%s387 + $0x4] sm:$0xf]
    %v390 = vld [vmem:[%s387 + $0x8] sm:$0xf]
    %v391 = vld [vmem:[%s387 + $0xc] sm:$0xf]
    %v392 = vld [vmem:[%s387 + $0x10] sm:$0xf]
    %v393 = vld [vmem:[%s387 + $0x14] sm:$0xf]
    %v394 = vld [vmem:[%s387 + $0x18] sm:$0xf]
    %v395 = vld [vmem:[%s387 + $0x1c] sm:$0xf]
    %v404 = vunpack.c.l.b16 %v388
    %v405 = vunpack.c.l.b16 %v389
    %v406 = vunpack.c.l.b16 %v390
    %v407 = vunpack.c.l.b16 %v391
    %v408 = vunpack.c.l.b16 %v392
    %v409 = vunpack.c.l.b16 %v393
    %v410 = vunpack.c.l.b16 %v394
    %v411 = vunpack.c.l.b16 %v395
    %v412 = vpack.c.b16 %v405, %v404
    %v413 = vpack.c.b16 %v407, %v406
    %v414 = vpack.c.b16 %v409, %v408
    %v415 = vpack.c.b16 %v411, %v410
    %v421 = vsel %vm170, %v386, 0
    %423 = vmatprep.subr.bf16.mxu0 0
    %424 = vmatpush1.bf16.msra.mxu0 0
    %425 = vmatprep.subr.bf16.mxu0 0
    %426 = vmatpush1.bf16.msra.mxu0 0
    %427 = vmatprep.subr.bf16.mxu0 0
    %428 = vmatpush1.bf16.msra.mxu0 0
    %429 = vmatprep.subr.bf16.mxu0 0
    %430 = vmatpush1.bf16.msra.mxu0 0
    %431 = vmatprep.subr.bf16.mxu0 0
    %432 = vmatpush1.bf16.msra.mxu0 %v415
    %433 = vmatprep.subr.bf16.mxu0 0
    %434 = vmatpush1.bf16.msra.mxu0 %v414
    %435 = vmatprep.subr.bf16.mxu0 0
    %436 = vmatpush1.bf16.msra.mxu0 %v413
    %437 = vmatprep.subr.bf16.mxu0 0
    %438 = vmatpush1.bf16.msra.mxu0 %v412
    %439 = vmatprep.subr.bf16.mxu0 0
    %440 = vmatpush2.bf16.msra.mxu0 0
    %441 = vmatprep.subr.bf16.mxu0 0
    %442 = vmatpush2.bf16.msra.mxu0 0
    %443 = vmatprep.subr.bf16.mxu0 0
    %444 = vmatpush2.bf16.msra.mxu0 0
    %445 = vmatprep.subr.bf16.mxu0 0
    %446 = vmatpush2.bf16.msra.mxu0 0
    %447 = vmatprep.subr.bf16.mxu0 0
    %448 = vmatpush2.bf16.msra.mxu0 0
    %449 = vmatprep.subr.bf16.mxu0 0
    %450 = vmatpush2.bf16.msra.mxu0 0
    %451 = vmatprep.subr.bf16.mxu0 0
    %452 = vmatpush2.bf16.msra.mxu0 0
    %453 = vmatprep.subr.bf16.mxu0 0
    %454 = vmatpush2.bf16.msra.mxu0 0
    %455 = vmatprep.mubr.bf16.mxu0 0
    %456 = vmatmul.mubr.bf16.gmra.mxu0 %v421
    %v457 = vpop.f32.mrf.mxu0
    %v458 = vadd.f32 0.0, %v457
    %v459 = vpop.f32.mrf.mxu0
    %v460 = vpop.f32.mrf.mxu0
    %v461 = vpop.f32.mrf.mxu0
    %462 = vdwg.mxu0
    %v463 = vadd.f32 %v299, %v458
    %s464 = scalar_lea.vmem %s6, 1
    %v465 = vld [vmem:[%s464] sm:$0x1]
    %v467 = vlaneseq
    %v468 = vshrl.u32 %v467, 7
    %v469 = vsub.s32 0, %v468
    %v470 = vrot.slane %v465, %v469
    %v472 = vadd.f32 %v463, %v470
    %v473 = vpack.c.bf16 %v472, %v472
    %s474 = scalar_lea.vmem [#allocation2], 64
    %v475 = vld [vmem:[%s474] sm:$0xf]
    %v476 = vld [vmem:[%s474 + $0x4] sm:$0xf]
    %v477 = vld [vmem:[%s474 + $0x8] sm:$0xf]
    %v478 = vld [vmem:[%s474 + $0xc] sm:$0xf]
    %v479 = vld [vmem:[%s474 + $0x10] sm:$0xf]
    %v480 = vld [vmem:[%s474 + $0x14] sm:$0xf]
    %v481 = vld [vmem:[%s474 + $0x18] sm:$0xf]
    %v482 = vld [vmem:[%s474 + $0x1c] sm:$0xf]
    %s483 = scalar_lea.vmem %s4, 2
    %v484 = vld [vmem:[%s483] sm:$0x1]
    %v486 = vlaneseq
    %v487 = vshrl.u32 %v486, 7
    %v488 = vsub.s32 0, %v487
    %v489 = vrot.slane %v484, %v488
    %v499 = vunpack.c.l.b16 %v475
    %v500 = vunpack.c.l.b16 %v476
    %v501 = vunpack.c.l.b16 %v477
    %v502 = vunpack.c.l.b16 %v478
    %v503 = vunpack.c.l.b16 %v479
    %v504 = vunpack.c.l.b16 %v480
    %v505 = vunpack.c.l.b16 %v481
    %v506 = vunpack.c.l.b16 %v482
    %v507 = vpack.c.b16 %v500, %v499
    %v508 = vpack.c.b16 %v502, %v501
    %v509 = vpack.c.b16 %v504, %v503
    %v510 = vpack.c.b16 %v506, %v505
    %v516 = vsel %vm170, %v473, 0
    %518 = vmatprep.subr.bf16.mxu0 0
    %519 = vmatpush1.bf16.msra.mxu0 0
    %520 = vmatprep.subr.bf16.mxu0 0
    %521 = vmatpush1.bf16.msra.mxu0 0
    %522 = vmatprep.subr.bf16.mxu0 0
    %523 = vmatpush1.bf16.msra.mxu0 0
    %524 = vmatprep.subr.bf16.mxu0 0
    %525 = vmatpush1.bf16.msra.mxu0 0
    %526 = vmatprep.subr.bf16.mxu0 0
    %527 = vmatpush1.bf16.msra.mxu0 %v510
    %528 = vmatprep.subr.bf16.mxu0 0
    %529 = vmatpush1.bf16.msra.mxu0 %v509
    %530 = vmatprep.subr.bf16.mxu0 0
    %531 = vmatpush1.bf16.msra.mxu0 %v508
    %532 = vmatprep.subr.bf16.mxu0 0
    %533 = vmatpush1.bf16.msra.mxu0 %v507
    %534 = vmatprep.subr.bf16.mxu0 0
    %535 = vmatpush2.bf16.msra.mxu0 0
    %536 = vmatprep.subr.bf16.mxu0 0
    %537 = vmatpush2.bf16.msra.mxu0 0
    %538 = vmatprep.subr.bf16.mxu0 0
    %539 = vmatpush2.bf16.msra.mxu0 0
    %540 = vmatprep.subr.bf16.mxu0 0
    %541 = vmatpush2.bf16.msra.mxu0 0
    %542 = vmatprep.subr.bf16.mxu0 0
    %543 = vmatpush2.bf16.msra.mxu0 0
    %544 = vmatprep.subr.bf16.mxu0 0
    %545 = vmatpush2.bf16.msra.mxu0 0
    %546 = vmatprep.subr.bf16.mxu0 0
    %547 = vmatpush2.bf16.msra.mxu0 0
    %548 = vmatprep.subr.bf16.mxu0 0
    %549 = vmatpush2.bf16.msra.mxu0 0
    %550 = vmatprep.mubr.bf16.mxu0 0
    %551 = vmatmul.mubr.bf16.gmra.mxu0 %v516
    %v552 = vpop.f32.mrf.mxu0
    %v553 = vadd.f32 %v489, %v552
    %v554 = vpop.f32.mrf.mxu0
    %v555 = vpop.f32.mrf.mxu0
    %v556 = vpop.f32.mrf.mxu0
    %557 = vdwg.mxu0
    %v558 = vmax.f32 %v553, 0.0
    %v559 = vpack.c.bf16 %v558, %v558
    %s560 = scalar_lea.vmem [#allocation4], 64
    %v561 = vld [vmem:[%s560] sm:$0xf]
    %v562 = vld [vmem:[%s560 + $0x4] sm:$0xf]
    %v563 = vld [vmem:[%s560 + $0x8] sm:$0xf]
    %v564 = vld [vmem:[%s560 + $0xc] sm:$0xf]
    %v565 = vld [vmem:[%s560 + $0x10] sm:$0xf]
    %v566 = vld [vmem:[%s560 + $0x14] sm:$0xf]
    %v567 = vld [vmem:[%s560 + $0x18] sm:$0xf]
    %v568 = vld [vmem:[%s560 + $0x1c] sm:$0xf]
    %v577 = vunpack.c.l.b16 %v561
    %v578 = vunpack.c.l.b16 %v562
    %v579 = vunpack.c.l.b16 %v563
    %v580 = vunpack.c.l.b16 %v564
    %v581 = vunpack.c.l.b16 %v565
    %v582 = vunpack.c.l.b16 %v566
    %v583 = vunpack.c.l.b16 %v567
    %v584 = vunpack.c.l.b16 %v568
    %v585 = vpack.c.b16 %v578, %v577
    %v586 = vpack.c.b16 %v580, %v579
    %v587 = vpack.c.b16 %v582, %v581
    %v588 = vpack.c.b16 %v584, %v583
    %v594 = vsel %vm170, %v559, 0
    %596 = vmatprep.subr.bf16.mxu0 0
    %597 = vmatpush1.bf16.msra.mxu0 0
    %598 = vmatprep.subr.bf16.mxu0 0
    %599 = vmatpush1.bf16.msra.mxu0 0
    %600 = vmatprep.subr.bf16.mxu0 0
    %601 = vmatpush1.bf16.msra.mxu0 0
    %602 = vmatprep.subr.bf16.mxu0 0
    %603 = vmatpush1.bf16.msra.mxu0 0
    %604 = vmatprep.subr.bf16.mxu0 0
    %605 = vmatpush1.bf16.msra.mxu0 %v588
    %606 = vmatprep.subr.bf16.mxu0 0
    %607 = vmatpush1.bf16.msra.mxu0 %v587
    %608 = vmatprep.subr.bf16.mxu0 0
    %609 = vmatpush1.bf16.msra.mxu0 %v586
    %610 = vmatprep.subr.bf16.mxu0 0
    %611 = vmatpush1.bf16.msra.mxu0 %v585
    %612 = vmatprep.subr.bf16.mxu0 0
    %613 = vmatpush2.bf16.msra.mxu0 0
    %614 = vmatprep.subr.bf16.mxu0 0
    %615 = vmatpush2.bf16.msra.mxu0 0
    %616 = vmatprep.subr.bf16.mxu0 0
    %617 = vmatpush2.bf16.msra.mxu0 0
    %618 = vmatprep.subr.bf16.mxu0 0
    %619 = vmatpush2.bf16.msra.mxu0 0
    %620 = vmatprep.subr.bf16.mxu0 0
    %621 = vmatpush2.bf16.msra.mxu0 0
    %622 = vmatprep.subr.bf16.mxu0 0
    %623 = vmatpush2.bf16.msra.mxu0 0
    %624 = vmatprep.subr.bf16.mxu0 0
    %625 = vmatpush2.bf16.msra.mxu0 0
    %626 = vmatprep.subr.bf16.mxu0 0
    %627 = vmatpush2.bf16.msra.mxu0 0
    %628 = vmatprep.mubr.bf16.mxu0 0
    %629 = vmatmul.mubr.bf16.gmra.mxu0 %v594
    %v630 = vpop.f32.mrf.mxu0
    %v631 = vadd.f32 0.0, %v630
    %v632 = vpop.f32.mrf.mxu0
    %v633 = vpop.f32.mrf.mxu0
    %v634 = vpop.f32.mrf.mxu0
    %635 = vdwg.mxu0
    %v636 = vadd.f32 %v472, %v631
    %s637 = scalar_lea.vmem %s6, 2
    %v638 = vld [vmem:[%s637] sm:$0x1]
    %v640 = vlaneseq
    %v641 = vshrl.u32 %v640, 7
    %v642 = vsub.s32 0, %v641
    %v643 = vrot.slane %v638, %v642
    %v645 = vadd.f32 %v636, %v643
    %v646 = vpack.c.bf16 %v645, %v645
    %v647 = vld [vmem:[%s7] sm:$0xf]
    %v648 = vld [vmem:[%s7 + $0x4] sm:$0xf]
    %v649 = vld [vmem:[%s7 + $0x8] sm:$0xf]
    %v650 = vld [vmem:[%s7 + $0xc] sm:$0xf]
    %v651 = vld [vmem:[%s7 + $0x10] sm:$0xf]
    %v652 = vld [vmem:[%s7 + $0x14] sm:$0xf]
    %v653 = vld [vmem:[%s7 + $0x18] sm:$0xf]
    %v654 = vld [vmem:[%s7 + $0x1c] sm:$0xf]
    %v655 = vld [vmem:[%s8] sm:$0x1]
    %v657 = vlaneseq
    %v658 = vshrl.u32 %v657, 7
    %v659 = vsub.s32 0, %v658
    %v660 = vrot.slane %v655, %v659
    %v670 = vunpack.c.l.b16 %v647
    %v671 = vunpack.c.l.b16 %v648
    %v672 = vunpack.c.l.b16 %v649
    %v673 = vunpack.c.l.b16 %v650
    %v674 = vunpack.c.l.b16 %v651
    %v675 = vunpack.c.l.b16 %v652
    %v676 = vunpack.c.l.b16 %v653
    %v677 = vunpack.c.l.b16 %v654
    %v678 = vpack.c.b16 %v671, %v670
    %v679 = vpack.c.b16 %v673, %v672
    %v680 = vpack.c.b16 %v675, %v674
    %v681 = vpack.c.b16 %v677, %v676
    %v687 = vsel %vm170, %v646, 0
    %689 = vmatprep.subr.bf16.mxu0 0
    %690 = vmatpush1.bf16.msra.mxu0 0
    %691 = vmatprep.subr.bf16.mxu0 0
    %692 = vmatpush1.bf16.msra.mxu0 0
    %693 = vmatprep.subr.bf16.mxu0 0
    %694 = vmatpush1.bf16.msra.mxu0 0
    %695 = vmatprep.subr.bf16.mxu0 0
    %696 = vmatpush1.bf16.msra.mxu0 0
    %697 = vmatprep.subr.bf16.mxu0 0
    %698 = vmatpush1.bf16.msra.mxu0 %v681
    %699 = vmatprep.subr.bf16.mxu0 0
    %700 = vmatpush1.bf16.msra.mxu0 %v680
    %701 = vmatprep.subr.bf16.mxu0 0
    %702 = vmatpush1.bf16.msra.mxu0 %v679
    %703 = vmatprep.subr.bf16.mxu0 0
    %704 = vmatpush1.bf16.msra.mxu0 %v678
    %705 = vmatprep.subr.bf16.mxu0 0
    %706 = vmatpush2.bf16.msra.mxu0 0
    %707 = vmatprep.subr.bf16.mxu0 0
    %708 = vmatpush2.bf16.msra.mxu0 0
    %709 = vmatprep.subr.bf16.mxu0 0
    %710 = vmatpush2.bf16.msra.mxu0 0
    %711 = vmatprep.subr.bf16.mxu0 0
    %712 = vmatpush2.bf16.msra.mxu0 0
    %713 = vmatprep.subr.bf16.mxu0 0
    %714 = vmatpush2.bf16.msra.mxu0 0
    %715 = vmatprep.subr.bf16.mxu0 0
    %716 = vmatpush2.bf16.msra.mxu0 0
    %717 = vmatprep.subr.bf16.mxu0 0
    %718 = vmatpush2.bf16.msra.mxu0 0
    %719 = vmatprep.subr.bf16.mxu0 0
    %720 = vmatpush2.bf16.msra.mxu0 0
    %721 = vmatprep.mubr.bf16.mxu0 0
    %722 = vmatmul.mubr.bf16.gmra.mxu0 %v687
    %v723 = vpop.f32.mrf.mxu0
    %v724 = vadd.f32 %v660, %v723
    %v725 = vpop.f32.mrf.mxu0
    %v726 = vpop.f32.mrf.mxu0
    %v727 = vpop.f32.mrf.mxu0
    %728 = vdwg.mxu0
    %729 = vst.msk [vmem:[%s9] sm:$0xff] %vm85, %v724
    // Predicated region
    $region46: #{encoder_forward.1} parent=1 // pred_check
      _
    $region47: #{encoder_forward.1} parent=1 // pred_check_branch
      %731 = sbr.rel (0) target = $region49
    $region48: #{encoder_forward.1} parent=1 // pred_region
      _
    $region49: #{encoder_forward.1} parent=1 // pred_fallthru
      _
    // Predicated region
    $region50: #{encoder_forward.1} parent=1 // pred_check
      _
    $region51: #{encoder_forward.1} parent=1 // pred_check_branch
      %733 = sbr.rel (0) target = $region53
    $region52: #{encoder_forward.1} parent=1 // pred_region
      _
    $region53: #{encoder_forward.1} parent=1 // pred_fallthru
      _
    %734 = vsyncpa [#allocation3], 1
    %735 = vsyncpa [#allocation5], 1

</llo_original>
